<compile_context>
chip_gen: v7x
topology: tpu7x:2x2x1
jax: 0.10.0
libtpu: 0.0.40
codegen_flags: <defaults>
</compile_context>

<pallas_src>
import functools
import math

import jax
import jax.numpy as jnp
import numpy as np
from jax.experimental import pallas as pl
from jax.experimental.pallas import tpu as pltpu


def _round_up(x, m):
    return ((x + m - 1) // m) * m


# ----------------------------- Pallas kernel ---------------------------------

def _fused_conv_kernel(x_ref, w_ref, b_ref, o_ref, *, k, sw, tl):
    """One (batch, row-tile) step: dense stride-1 conv on a row-flattened tile.

    x_ref: (1, Cin, L_blk)   bf16  padded rows of this tile, row stride `sw`
    w_ref: (k, Cout, k*Cin)  bf16  per-dy weights, contraction index = dx*Cin+c
    b_ref: (Cout, 1)         f32   bias
    o_ref: (1, Cout, tl)     tl = TR*sw (row stride sw; garbage cols cropped
                             outside the kernel).
    """
    acc = None
    for dy in range(k):
        # One ref load per dy; dx shifts are in-register lane slices.
        base = x_ref[0, :, dy * sw: dy * sw + tl + (k - 1)]        # [Cin, tl+k-1]
        if k > 1:
            stacked = jnp.concatenate(
                [base[:, dx: dx + tl] for dx in range(k)], axis=0)  # [k*Cin, tl]
        else:
            stacked = base[:, :tl]
        d = jnp.dot(w_ref[dy], stacked, preferred_element_type=jnp.float32)
        acc = d if acc is None else acc + d                         # sum of dots
    o_ref[0, :, :] = (acc + b_ref[...]).astype(o_ref.dtype)


# ------------------------------ Tiling plan -----------------------------------

def _vmem_capacity_bytes():
    try:
        info = pltpu.get_tpu_info()
        return int(getattr(info, "vmem_capacity_bytes", 64 * 1024 * 1024))
    except Exception:
        return 64 * 1024 * 1024        # v7x-safe fallback


def _choose_tiling(Hd, Wp, Cin, Cout, k, n_batch, out_itemsize):
    """Pick (sw, tr, n_tiles, m) minimizing padded HBM bytes under VMEM budget."""
    cap = _vmem_capacity_bytes()
    budget = int(cap * 0.55)           # double-buffered blocks must fit comfortably
    m_min = k if k > 1 else 0
    best = None
    sw_cands = sorted({Wp} | {_round_up(Wp, a) for a in (8, 16, 32, 64, 128)})
    for sw in sw_cands:
        g = 128 // math.gcd(sw, 128)   # multi-tile tr (and m) must be multiples of g
        tr_cands = {Hd}
        t = g
        while t < Hd:
            tr_cands.add(t)
            t *= 2
        for tr in sorted(tr_cands):
            n_tiles = -(-Hd // tr)
            if n_tiles > 1 and (tr * sw) % 128 != 0:
                continue
            if n_tiles == 1:
                m = m_min
            else:
                m = _round_up(m_min, g) if m_min > 0 else 0
            tl = tr * sw
            l_blk = (tr + m) * sw
            in_blk = Cin * l_blk * 2
            out_blk = Cout * tl * out_itemsize
            w_bytes = k * Cout * k * Cin * 2
            tmp = k * Cin * tl * 2 + Cin * (tl + k) * 2 + 2 * Cout * tl * 4
            need = 2 * (in_blk + out_blk) + w_bytes + tmp + (1 << 16)
            cost = Cin * n_tiles * l_blk * 2 + Cout * n_tiles * tl * out_itemsize
            if n_batch * n_tiles < 2:
                cost = int(cost * 1.5)  # prefer >=2 parallel steps (v7x megacore)
            key = (0 if need <= budget else 1, cost, need)
            if best is None or key < best[0]:
                best = (key, sw, tr, n_tiles, m, need)
    _, sw, tr, n_tiles, m, need = best
    return sw, tr, n_tiles, m, need, cap


# ------------------------------ Module logic ----------------------------------

def upsample_conv_layer(x, weight, bias, *, kernel_size, stride, upsample=None,
                        out_dtype=jnp.float32):
    """Forward pass of UpsampleConvLayer.

    x:      [N, Cin, H, W]  (NCHW, like PyTorch)
    weight: [Cout, Cin, kh, kw]
    bias:   [Cout]
    returns [N, Cout, Ho, Wo]
    """
    N, Cin, H, W = x.shape
    Cout = weight.shape[0]
    k = int(kernel_size)
    p = k // 2

    if upsample:
        s = int(upsample)
        if s != upsample or s < 1:
            raise NotImplementedError("only integer nearest-upsample factors")
    else:
        s = 1

    Hu, Wu = H * s, W * s
    Hp, Wp = Hu + 2 * p, Wu + 2 * p
    Hd, Wd = Hp - k + 1, Wp - k + 1            # dense (stride-1) output size

    out_itemsize = jnp.dtype(out_dtype).itemsize
    sw, tr, n_tiles, m, vmem_need, vmem_cap = _choose_tiling(
        Hd, Wp, Cin, Cout, k, N, out_itemsize)
    nr_pad = tr + m                            # padded rows stored per tile chunk
    l_blk = nr_pad * sw
    tl = tr * sw
    hd_pad = n_tiles * tr

    # ---- width direction: bf16 cast + nearest repeat + reflect pad + tail ----
    xb = x.astype(jnp.bfloat16)
    if s > 1:
        xb = jnp.repeat(xb, s, axis=3)                                 # [N,Cin,H,Wu]
    if p:
        xb = jnp.pad(xb, ((0, 0), (0, 0), (0, 0), (p, p)), mode="reflect")
    if sw > Wp:
        xb = jnp.pad(xb, ((0, 0), (0, 0), (0, 0), (0, sw - Wp)))
    # xb: [N, Cin, H, sw]   (source rows; width already upsampled + padded)

    # ---- height direction: ONE static gather builds the per-tile chunks ----
    # chunk t, row i holds padded row rp = t*tr + i of the upsampled+padded
    # image, i.e. source row reflect(rp - p) // s of the original image.
    # TODO(synk): full in-kernel fold (manual row DMA from the original NCHW x
    # + in-kernel width expansion) would also remove this single gather pass.
    idx = np.arange(n_tiles * nr_pad)
    rp = np.minimum((idx // nr_pad) * tr + (idx % nr_pad), Hp - 1)
    u = rp - p
    u = np.where(u < 0, -u, u)
    u = np.where(u >= Hu, 2 * Hu - 2 - u, u)
    src_rows = (u // s).astype(np.int32)
    xg = jnp.take(xb, jnp.asarray(src_rows), axis=2)        # [N,Cin,n_tiles*nr_pad,sw]
    xg = xg.reshape(N, Cin, n_tiles * l_blk)

    # ---- weights: per-dy, lane-dense contraction  [k, Cout, k*Cin] ----
    wf = weight.transpose(2, 0, 3, 1).reshape(k, Cout, k * Cin).astype(jnp.bfloat16)
    b2d = bias.reshape(Cout, 1).astype(jnp.float32)

    kernel = functools.partial(_fused_conv_kernel, k=k, sw=sw, tl=tl)
    vmem_limit = int(min(0.9 * vmem_cap, max(1.5 * vmem_need, 32 * 1024 * 1024)))
    dense = pl.pallas_call(
        kernel,
        out_shape=jax.ShapeDtypeStruct((N, Cout, hd_pad * sw), out_dtype),
        grid_spec=pltpu.PrefetchScalarGridSpec(
            num_scalar_prefetch=0,
            grid=(N, n_tiles),
            in_specs=[
                pl.BlockSpec((1, Cin, l_blk), lambda n, t: (n, 0, t)),
                pl.BlockSpec((k, Cout, k * Cin), lambda n, t: (0, 0, 0)),
                pl.BlockSpec((Cout, 1), lambda n, t: (0, 0)),
            ],
            out_specs=pl.BlockSpec((1, Cout, tl), lambda n, t: (n, 0, t)),
        ),
        compiler_params=pltpu.CompilerParams(
            dimension_semantics=("parallel", "parallel"),
            vmem_limit_bytes=vmem_limit,
        ),
    )(xg, wf, b2d)

    # [N, Cout, hd_pad*sw] -> NCHW with NO transpose: crop garbage rows/cols,
    # apply stride.
    # TODO(synk): for stride>1, stride the rows inside the kernel instead of
    # computing the dense result and subsampling here.
    out = dense.reshape(N, Cout, hd_pad, sw)[:, :, 0:Hd:stride, 0:Wd:stride]
    return out


# --------------------------------- main ---------------------------------------

if __name__ == "__main__":
    in_channels, out_channels = 4, 8
    kernel_size, stride, upsample = 3, 1, 2

    key = jax.random.PRNGKey(0)
    kx, kw, kb = jax.random.split(key, 3)

    # Input: NCHW
    x = jax.random.normal(kx, (2, in_channels, 16, 16), dtype=jnp.float32)

    # Deterministic Conv2d-style init (uniform in +/- 1/sqrt(fan_in))
    fan_in = in_channels * kernel_size * kernel_size
    bound = 1.0 / (fan_in ** 0.5)
    weight = jax.random.uniform(
        kw, (out_channels, in_channels, kernel_size, kernel_size),
        minval=-bound, maxval=bound, dtype=jnp.float32)
    bias = jax.random.uniform(
        kb, (out_channels,), minval=-bound, maxval=bound, dtype=jnp.float32)

    fwd = jax.jit(functools.partial(
        upsample_conv_layer,
        kernel_size=kernel_size, stride=stride, upsample=upsample))

    out = fwd(x, weight, bias)
    jax.block_until_ready(out)

    # sanity: [2, 8, 32, 32] expected (16 -> upsample x2 -> 32, 'same' conv)
    assert out.shape == (2, out_channels, 32, 32), out.shape

    # numerical check vs plain XLA conv (f32 reference; bf16 matmul tolerance)
    p = kernel_size // 2
    x_ref = jnp.repeat(jnp.repeat(x, upsample, axis=2), upsample, axis=3)
    x_ref = jnp.pad(x_ref, ((0, 0), (0, 0), (p, p), (p, p)), mode="reflect")
    ref = jax.lax.conv_general_dilated(
        x_ref, weight, window_strides=(stride, stride), padding="VALID",
        dimension_numbers=("NCHW", "OIHW", "NCHW")) + bias[None, :, None, None]
    assert jnp.allclose(out, ref, atol=5e-2, rtol=5e-2), \
        float(jnp.max(jnp.abs(out - ref)))

    print("KERNEL_OK")
</pallas_src>

<mosaic_0001>
module attributes {stable_mosaic.version = 11 : i64} {
  func.func @_fused_conv_kernel(%arg0: i32, %arg1: i32, %arg2: memref<1x4x1190xbf16, #tpu.memory_space<vmem>>, %arg3: memref<3x8x12xbf16, #tpu.memory_space<vmem>>, %arg4: memref<8x1xf32, #tpu.memory_space<vmem>>, %arg5: memref<1x8x1088xf32, #tpu.memory_space<vmem>>) attributes {dimension_semantics = [#tpu.dimension_semantics<parallel>, #tpu.dimension_semantics<parallel>], iteration_bounds = array<i64: 2, 1>, scalar_prefetch = 0 : i64, scratch_operands = 0 : i64, tpu.core_type = #tpu.core_type<tc>, window_params = [{transform_indices = @transform_0, window_bounds = array<i64: 1, 4, 1190>}, {pipeline_mode = #tpu.pipeline_mode<synchronous>, transform_indices = @transform_1, window_bounds = array<i64: 3, 8, 12>}, {pipeline_mode = #tpu.pipeline_mode<synchronous>, transform_indices = @transform_2, window_bounds = array<i64: 8, 1>}, {transform_indices = @transform_3, window_bounds = array<i64: 1, 8, 1088>}]} {
    %c0 = arith.constant 0 : index
    %c0_0 = arith.constant 0 : index
    %c0_1 = arith.constant 0 : index
    %0 = vector.load %arg2[%c0, %c0_0, %c0_1] : memref<1x4x1190xbf16, #tpu.memory_space<vmem>>, vector<1x4x1090xbf16>
    %1 = vector.shape_cast %0 : vector<1x4x1090xbf16> to vector<4x1090xbf16>
    %2 = vector.extract_strided_slice %1 {offsets = [0, 0], sizes = [4, 1088], strides = [1, 1]} : vector<4x1090xbf16> to vector<4x1088xbf16>
    %3 = vector.extract_strided_slice %1 {offsets = [0, 1], sizes = [4, 1088], strides = [1, 1]} : vector<4x1090xbf16> to vector<4x1088xbf16>
    %4 = vector.extract_strided_slice %1 {offsets = [0, 2], sizes = [4, 1088], strides = [1, 1]} : vector<4x1090xbf16> to vector<4x1088xbf16>
    %5 = tpu.concatenate %2, %3, %4 in 0 : vector<4x1088xbf16>, vector<4x1088xbf16>, vector<4x1088xbf16> -> vector<12x1088xbf16>
    %c0_2 = arith.constant 0 : index
    %c0_3 = arith.constant 0 : index
    %c0_4 = arith.constant 0 : index
    %6 = vector.load %arg3[%c0_2, %c0_3, %c0_4] : memref<3x8x12xbf16, #tpu.memory_space<vmem>>, vector<1x8x12xbf16>
    %7 = vector.shape_cast %6 : vector<1x8x12xbf16> to vector<8x12xbf16>
    %cst = arith.constant dense<0.000000e+00> : vector<8x1088xf32>
    %8 = tpu.matmul %7, %5, %cst {dimension_numbers = #tpu.dot_dimension_numbers<[1], [0], [0], [1], [0, 0, 1, 1], [], []>} : vector<8x12xbf16>, vector<12x1088xbf16>, vector<8x1088xf32> -> vector<8x1088xf32>
    %c0_5 = arith.constant 0 : index
    %c0_6 = arith.constant 0 : index
    %c34 = arith.constant 34 : index
    %9 = vector.load %arg2[%c0_5, %c0_6, %c34] : memref<1x4x1190xbf16, #tpu.memory_space<vmem>>, vector<1x4x1090xbf16>
    %10 = vector.shape_cast %9 : vector<1x4x1090xbf16> to vector<4x1090xbf16>
    %11 = vector.extract_strided_slice %10 {offsets = [0, 0], sizes = [4, 1088], strides = [1, 1]} : vector<4x1090xbf16> to vector<4x1088xbf16>
    %12 = vector.extract_strided_slice %10 {offsets = [0, 1], sizes = [4, 1088], strides = [1, 1]} : vector<4x1090xbf16> to vector<4x1088xbf16>
    %13 = vector.extract_strided_slice %10 {offsets = [0, 2], sizes = [4, 1088], strides = [1, 1]} : vector<4x1090xbf16> to vector<4x1088xbf16>
    %14 = tpu.concatenate %11, %12, %13 in 0 : vector<4x1088xbf16>, vector<4x1088xbf16>, vector<4x1088xbf16> -> vector<12x1088xbf16>
    %c1 = arith.constant 1 : index
    %c0_7 = arith.constant 0 : index
    %c0_8 = arith.constant 0 : index
    %15 = vector.load %arg3[%c1, %c0_7, %c0_8] : memref<3x8x12xbf16, #tpu.memory_space<vmem>>, vector<1x8x12xbf16>
    %16 = vector.shape_cast %15 : vector<1x8x12xbf16> to vector<8x12xbf16>
    %cst_9 = arith.constant dense<0.000000e+00> : vector<8x1088xf32>
    %17 = tpu.matmul %16, %14, %cst_9 {dimension_numbers = #tpu.dot_dimension_numbers<[1], [0], [0], [1], [0, 0, 1, 1], [], []>} : vector<8x12xbf16>, vector<12x1088xbf16>, vector<8x1088xf32> -> vector<8x1088xf32>
    %18 = arith.addf %8, %17 : vector<8x1088xf32>
    %c0_10 = arith.constant 0 : index
    %c0_11 = arith.constant 0 : index
    %c68 = arith.constant 68 : index
    %19 = vector.load %arg2[%c0_10, %c0_11, %c68] : memref<1x4x1190xbf16, #tpu.memory_space<vmem>>, vector<1x4x1090xbf16>
    %20 = vector.shape_cast %19 : vector<1x4x1090xbf16> to vector<4x1090xbf16>
    %21 = vector.extract_strided_slice %20 {offsets = [0, 0], sizes = [4, 1088], strides = [1, 1]} : vector<4x1090xbf16> to vector<4x1088xbf16>
    %22 = vector.extract_strided_slice %20 {offsets = [0, 1], sizes = [4, 1088], strides = [1, 1]} : vector<4x1090xbf16> to vector<4x1088xbf16>
    %23 = vector.extract_strided_slice %20 {offsets = [0, 2], sizes = [4, 1088], strides = [1, 1]} : vector<4x1090xbf16> to vector<4x1088xbf16>
    %24 = tpu.concatenate %21, %22, %23 in 0 : vector<4x1088xbf16>, vector<4x1088xbf16>, vector<4x1088xbf16> -> vector<12x1088xbf16>
    %c2 = arith.constant 2 : index
    %c0_12 = arith.constant 0 : index
    %c0_13 = arith.constant 0 : index
    %25 = vector.load %arg3[%c2, %c0_12, %c0_13] : memref<3x8x12xbf16, #tpu.memory_space<vmem>>, vector<1x8x12xbf16>
    %26 = vector.shape_cast %25 : vector<1x8x12xbf16> to vector<8x12xbf16>
    %cst_14 = arith.constant dense<0.000000e+00> : vector<8x1088xf32>
    %27 = tpu.matmul %26, %24, %cst_14 {dimension_numbers = #tpu.dot_dimension_numbers<[1], [0], [0], [1], [0, 0, 1, 1], [], []>} : vector<8x12xbf16>, vector<12x1088xbf16>, vector<8x1088xf32> -> vector<8x1088xf32>
    %28 = arith.addf %18, %27 : vector<8x1088xf32>
    %c0_15 = arith.constant 0 : index
    %c0_16 = arith.constant 0 : index
    %29 = vector.load %arg4[%c0_15, %c0_16] : memref<8x1xf32, #tpu.memory_space<vmem>>, vector<8x1xf32>
    %30 = vector.broadcast %29 : vector<8x1xf32> to vector<8x1088xf32>
    %31 = arith.addf %28, %30 : vector<8x1088xf32>
    %c0_17 = arith.constant 0 : index
    %c0_18 = arith.constant 0 : index
    %c0_19 = arith.constant 0 : index
    %32 = vector.load %arg5[%c0_17, %c0_18, %c0_19] : memref<1x8x1088xf32, #tpu.memory_space<vmem>>, vector<1x8x1088xf32>
    %33 = vector.shape_cast %32 : vector<1x8x1088xf32> to vector<8x1088xf32>
    %34 = vector.shape_cast %31 : vector<8x1088xf32> to vector<1x8x1088xf32>
    tpu.vector_store %arg5[%c0_17, %c0_18, %c0_19], %34 {strides = array<i32>} : memref<1x8x1088xf32, #tpu.memory_space<vmem>>, vector<1x8x1088xf32>,
    return
  }
  func.func @transform_0(%arg0: i32, %arg1: i32) -> (i32, i32, i32) {
    %c0_i32 = arith.constant 0 : i32
    %c0_i32_0 = arith.constant 0 : i32
    return %arg0, %c0_i32, %arg1 : i32, i32, i32
  }
  func.func @transform_1(%arg0: i32, %arg1: i32) -> (i32, i32, i32) {
    %c0_i32 = arith.constant 0 : i32
    %c0_i32_0 = arith.constant 0 : i32
    %c0_i32_1 = arith.constant 0 : i32
    %c0_i32_2 = arith.constant 0 : i32
    return %c0_i32, %c0_i32_0, %c0_i32_1 : i32, i32, i32
  }
  func.func @transform_2(%arg0: i32, %arg1: i32) -> (i32, i32) {
    %c0_i32 = arith.constant 0 : i32
    %c0_i32_0 = arith.constant 0 : i32
    %c0_i32_1 = arith.constant 0 : i32
    return %c0_i32, %c0_i32_0 : i32, i32
  }
  func.func @transform_3(%arg0: i32, %arg1: i32) -> (i32, i32, i32) {
    %c0_i32 = arith.constant 0 : i32
    %c0_i32_0 = arith.constant 0 : i32
    return %arg0, %c0_i32, %arg1 : i32, i32, i32
  }
}

</mosaic_0001>

<llo_original>
// kernel: upsample_conv_layer.1
$region0: #{upsample_conv_layer.1}
  #allocation0 [shape = 'u32[]', space=smem, size = 0x4, offset = 0x4, fixed_abs, tag = 'smem constant byte address 0x4 - core index']
  #allocation1 [shape = 'u32[144,128]{1,0:T(1,128)}', space=vmem, size = 0x12000, scoped, tag = 'internal scratch']
  %s0 = inlined_call_operand.vmem [shape: bf16[2,4,1190], index: 0, kind: input, shape index: {}]
  %s1 = inlined_call_operand.vmem [shape: bf16[3,8,12], index: 1, kind: input, shape index: {}]
  %s2 = inlined_call_operand.vmem [shape: f32[8,1], index: 2, kind: input, shape index: {}]
  %s3 = inlined_call_operand.vmem [shape: f32[2,8,1088], index: 3, kind: output, shape index: {}]
  %s4 = sld [smem:[#allocation0]]
  $region45: #{upsample_conv_layer.1} parent=0
    _
  %s6 = ssub.s32 1, %s4
  %s7 = scalar_select 0, %s6, %s4
  loop: start=0, step=1, limit=4
  $region2: #{upsample_conv_layer.1} parent=0 // loop_pre_header
    _
  $region3: #{upsample_conv_layer.1} parent=0 // loop_header
    %s9 = sphi 0, %s13
    %p10 = scmp.ge.s32.totalorder %s9, 4
    %s16 = sphi 0, %s28
    %s17 = sphi 0, %s24
    %s18 = sphi 0, %s16
    %s19 = sphi 0, %s17
    %s20 = sphi 0, %s18
    %s21 = sphi 0, %s19
    %s33 = sphi 0, %s35
    %s36 = sphi 0, %s33
    %s37 = sphi 0, %s36
    %s53 = sphi 0, %s37
    %s57 = sphi 0, %s57
    %s59 = sphi 0, %s57
    %s60 = sphi 0, %s59
    %s74 = sphi 0, %s60
    %s78 = sphi 0, %s78
    %s80 = sphi 0, %s78
    %s81 = sphi 0, %s80
    %s95 = sphi 0, %s81
    %s103 = sphi 0, %s105
    %s106 = sphi 0, %s103
    %s107 = sphi 0, %s106
    %s123 = sphi 0, %s107
  $region4: #{upsample_conv_layer.1} parent=0 // loop_header_branch
    %12 = sbr.rel (%p10) target = $region8
  $region5: #{upsample_conv_layer.1} parent=0 // loop_body
    %s14 = ssub.s32 %s9, 1
    %s15 = ssub.s32 %s9, 2
    %s22 = sadd.s32 1, %s17
    %p23 = scmp.ge.s32.totalorder %s22, 1
    %s24 = scalar_select %p23, 0, %s22
    %s25 = sadd.s32 1, %s16
    %s26 = scalar_select %p23, %s25, %s16
    %p27 = scmp.ge.s32.totalorder %s26, 2
    %s28 = scalar_select %p27, 0, %s26
    %s29 = ssub.s32 %s16, %s28
    %s30 = ssub.s32 %s17, %s24
    %s31 = sor.u32 %s29, %s30
    %p32 = scmp.eq.s32.totalorder %s31, 0
    %s34 = sadd.s32 %s33, 1
    %s35 = scalar_select %p32, %s33, %s34
    %p38 = pneg %p32
    %p39 = scmp.eq.s32.totalorder %s9, 1
    %p40 = por %p38, %p39
    %p41 = scmp.ne.s32.totalorder %s33, %s36
    %p42 = scmp.eq.s32.totalorder %s9, 0
    %p43 = por %p41, %p42
    %p44 = scmp.ne.s32.totalorder %s33, %s36
    %p45 = scmp.eq.s32.totalorder %s14, 1
    %p46 = por %p44, %p45
    %p47 = scmp.ne.s32.totalorder %s36, %s37
    %p48 = scmp.eq.s32.totalorder %s14, 0
    %p49 = por %p47, %p48
    %p50 = scmp.ne.s32.totalorder %s36, %s37
    %p51 = scmp.eq.s32.totalorder %s15, 1
    %p52 = por %p50, %p51
    %p54 = scmp.ne.s32.totalorder %s37, %s53
    %p55 = scmp.eq.s32.totalorder %s15, 0
    %p56 = por %p54, %p55
    %s58 = sadd.s32 %s57, 1
    %p61 = scmp.eq.s32.totalorder %s9, 1
    %p62 = scmp.ne.s32.totalorder %s57, %s59
    %p63 = scmp.eq.s32.totalorder %s9, 0
    %p64 = por %p62, %p63
    %p65 = scmp.ne.s32.totalorder %s57, %s59
    %p66 = scmp.eq.s32.totalorder %s14, 1
    %p67 = por %p65, %p66
    %p68 = scmp.ne.s32.totalorder %s59, %s60
    %p69 = scmp.eq.s32.totalorder %s14, 0
    %p70 = por %p68, %p69
    %p71 = scmp.ne.s32.totalorder %s59, %s60
    %p72 = scmp.eq.s32.totalorder %s15, 1
    %p73 = por %p71, %p72
    %p75 = scmp.ne.s32.totalorder %s60, %s74
    %p76 = scmp.eq.s32.totalorder %s15, 0
    %p77 = por %p75, %p76
    %s79 = sadd.s32 %s78, 1
    %p82 = scmp.eq.s32.totalorder %s9, 1
    %p83 = scmp.ne.s32.totalorder %s78, %s80
    %p84 = scmp.eq.s32.totalorder %s9, 0
    %p85 = por %p83, %p84
    %p86 = scmp.ne.s32.totalorder %s78, %s80
    %p87 = scmp.eq.s32.totalorder %s14, 1
    %p88 = por %p86, %p87
    %p89 = scmp.ne.s32.totalorder %s80, %s81
    %p90 = scmp.eq.s32.totalorder %s14, 0
    %p91 = por %p89, %p90
    %p92 = scmp.ne.s32.totalorder %s80, %s81
    %p93 = scmp.eq.s32.totalorder %s15, 1
    %p94 = por %p92, %p93
    %p96 = scmp.ne.s32.totalorder %s81, %s95
    %p97 = scmp.eq.s32.totalorder %s15, 0
    %p98 = por %p96, %p97
    %s99 = ssub.s32 %s16, %s28
    %s100 = ssub.s32 %s17, %s24
    %s101 = sor.u32 %s99, %s100
    %p102 = scmp.eq.s32.totalorder %s101, 0
    %s104 = sadd.s32 %s103, 1
    %s105 = scalar_select %p102, %s103, %s104
    %p108 = pneg %p102
    %p109 = scmp.eq.s32.totalorder %s9, 1
    %p110 = por %p108, %p109
    %p111 = scmp.ne.s32.totalorder %s103, %s106
    %p112 = scmp.eq.s32.totalorder %s9, 0
    %p113 = por %p111, %p112
    %p114 = scmp.ne.s32.totalorder %s103, %s106
    %p115 = scmp.eq.s32.totalorder %s14, 1
    %p116 = por %p114, %p115
    %p117 = scmp.ne.s32.totalorder %s106, %s107
    %p118 = scmp.eq.s32.totalorder %s14, 0
    %p119 = por %p117, %p118
    %p120 = scmp.ne.s32.totalorder %s106, %s107
    %p121 = scmp.eq.s32.totalorder %s15, 1
    %p122 = por %p120, %p121
    %p124 = scmp.ne.s32.totalorder %s107, %s123
    %p125 = scmp.eq.s32.totalorder %s15, 0
    %p126 = por %p124, %p125
    %p127 = scmp.le.s32.totalorder 1, %s9
    %p128 = scmp.lt.s32.totalorder %s9, 3
    %p129 = pnand %p127, %p128
    %p130 = pneg %p129
    // Predicated region
    $region9: #{upsample_conv_layer.1} parent=5 // pred_check
      _
    $region10: #{upsample_conv_layer.1} parent=5 // pred_check_branch
      %132 = sbr.rel (%p129) target = $region12
    $region11: #{upsample_conv_layer.1} parent=5 // pred_region
      %s133 = ssub.s32 %s9, 1
      // Predicated region
      $region13: #{upsample_conv_layer.1} parent=11 // pred_check
        %p134 = pneg %p70
      $region14: #{upsample_conv_layer.1} parent=11 // pred_check_branch
        %136 = sbr.rel (%p134) target = $region16
      $region15: #{upsample_conv_layer.1} parent=11 // pred_region
        _
      $region16: #{upsample_conv_layer.1} parent=11 // pred_fallthru
        _
      // Predicated region
      $region17: #{upsample_conv_layer.1} parent=11 // pred_check
        %p137 = pneg %p91
      $region18: #{upsample_conv_layer.1} parent=11 // pred_check_branch
        %139 = sbr.rel (%p137) target = $region20
      $region19: #{upsample_conv_layer.1} parent=11 // pred_region
        _
      $region20: #{upsample_conv_layer.1} parent=11 // pred_fallthru
        _
    $region12: #{upsample_conv_layer.1} parent=5 // pred_fallthru
      _
    %p140 = scmp.lt.s32.totalorder %s9, 2
    // Predicated region
    $region21: #{upsample_conv_layer.1} parent=5 // pred_check
      %p141 = pneg %p140
    $region22: #{upsample_conv_layer.1} parent=5 // pred_check_branch
      %143 = sbr.rel (%p141) target = $region24
    $region23: #{upsample_conv_layer.1} parent=5 // pred_region
      // Predicated region
      $region25: #{upsample_conv_layer.1} parent=23 // pred_check
        %p144 = pneg %p43
      $region26: #{upsample_conv_layer.1} parent=23 // pred_check_branch
        %146 = sbr.rel (%p144) target = $region28
      $region27: #{upsample_conv_layer.1} parent=23 // pred_region
        %s147 = smul.u32 10, %s17
        %p148 = scmp.lt.s32.totalorder %s16, 1
        %s149 = scalar_select %p148, %s16, 1
        %p150 = scmp.lt.s32.totalorder %s147, 9
        %s151 = scalar_select %p150, %s147, 9
        %s152 = smul.addr %s149, 10
        %s153 = sadd.s32 %s151, %s152
        %s154 = smul.addr %s153, 2
        %s155 = scalar_lea.vmem %s0, %s154
        %s156 = smul.u32 10, %s17
      $region28: #{upsample_conv_layer.1} parent=23 // pred_fallthru
        _
    $region24: #{upsample_conv_layer.1} parent=5 // pred_fallthru
      _
    %p157 = scmp.le.s32.totalorder 1, %s9
    %p158 = scmp.lt.s32.totalorder %s9, 3
    %p159 = pnand %p157, %p158
    %p160 = pneg %p159
    // Predicated region
    $region29: #{upsample_conv_layer.1} parent=5 // pred_check
      _
    $region30: #{upsample_conv_layer.1} parent=5 // pred_check_branch
      %162 = sbr.rel (%p159) target = $region32
    $region31: #{upsample_conv_layer.1} parent=5 // pred_region
      %s163 = ssub.s32 %s9, 1
      %s164 = smul.u32 10, %s19
      %p165 = scmp.lt.s32.totalorder %s18, 1
      %s166 = scalar_select %p165, %s18, 1
      %p167 = scmp.lt.s32.totalorder %s164, 9
      %s168 = scalar_select %p167, %s164, 9
      %s169 = smul.addr %s166, 10
      %s170 = sadd.s32 %s168, %s169
      %s171 = smul.addr %s170, 2
      %s172 = scalar_lea.vmem %s0, %s171
      %p173 = pneg %p49
      %p174 = pneg %p46
      %p175 = pneg %p70
      %p176 = pneg %p67
      %p177 = pneg %p91
      %p178 = pneg %p88
      %p179 = pneg %p119
      %p180 = pneg %p116
      %s181 = smul.u32 9, %s19
      %p182 = scmp.lt.s32.totalorder %s18, 1
      %s183 = scalar_select %p182, %s18, 1
      %p184 = scmp.lt.s32.totalorder %s181, 8
      %s185 = scalar_select %p184, %s181, 8
      %s186 = smul.addr %s183, 9
      %s187 = sadd.s32 %s185, %s186
      %s188 = smul.addr %s187, 8
      %s189 = scalar_lea.vmem %s3, %s188
      %s190 = smul.u32 10, %s19
      %p191 = scmp.lt.s32.totalorder %s18, 1
      %s192 = scalar_select %p191, %s18, 1
      %p193 = scmp.lt.s32.totalorder %s190, 9
      %s194 = scalar_select %p193, %s190, 9
      %s195 = smul.addr %s192, 10
      %s196 = sadd.s32 %s194, %s195
      %s197 = smul.addr %s196, 2
      %s198 = scalar_lea.vmem %s0, %s197
      %s199 = smul.u32 10, %s19
      %s200 = smul.u32 9, %s19
      %p201 = scmp.lt.s32.totalorder %s18, 1
      %s202 = scalar_select %p201, %s18, 1
      %p203 = scmp.lt.s32.totalorder %s200, 8
      %s204 = scalar_select %p203, %s200, 8
      %s205 = smul.addr %s202, 9
      %s206 = sadd.s32 %s204, %s205
      %s207 = smul.addr %s206, 8
      %s208 = scalar_lea.vmem %s3, %s207
      %s209 = smul.u32 9, %s19
      %v211 = vld [vmem:[%s198] sm:$0xff]
      %v212 = vld [vmem:[%s198 + $0x8] sm:$0xff]
      %v213 = vld [vmem:[%s198 + $0x10] sm:$0x3]
      %v217 = vcombine.high %v211, %v211
      %v219 = vunpack.c.l.s4 1983009808
      %v220 = vunpack.c.0.s8 %v219
      %v221 = vlaneseq
      %v222 = vshrl.u32 %v221, 7
      %v223 = vsub.s32 %v220, %v222
      %v224 = vrot.slane %v211, %v223
      %v226 = vunpack.c.l.s4 1983009808
      %v227 = vunpack.c.0.s8 %v226
      %v228 = vlaneseq
      %v229 = vshrl.u32 %v228, 7
      %v230 = vsub.s32 %v227, %v229
      %v231 = vrot.slane %v217, %v230
      %v232 = vcombine.high %v224, %v224
      %v233 = vcombine.high %v231, %v231
      %v234 = vcombine.high %v212, %v212
      %v236 = vunpack.c.l.s4 1983009808
      %v237 = vunpack.c.0.s8 %v236
      %v238 = vlaneseq
      %v239 = vshrl.u32 %v238, 7
      %v240 = vsub.s32 %v237, %v239
      %v241 = vrot.slane %v212, %v240
      %v243 = vunpack.c.l.s4 1983009808
      %v244 = vunpack.c.0.s8 %v243
      %v245 = vlaneseq
      %v246 = vshrl.u32 %v245, 7
      %v247 = vsub.s32 %v244, %v246
      %v248 = vrot.slane %v234, %v247
      %v249 = vcombine.high %v241, %v241
      %v250 = vcombine.high %v248, %v248
      %v252 = vunpack.c.l.s4 1983009808
      %v253 = vunpack.c.0.s8 %v252
      %v254 = vlaneseq
      %v255 = vshrl.u32 %v254, 7
      %v256 = vsub.s32 %v253, %v255
      %v257 = vrot.slane %v213, %v256
      %v258 = vcombine.low %v211, %v211
      %v260 = vunpack.c.l.s4 1983009808
      %v261 = vunpack.c.0.s8 %v260
      %v262 = vlaneseq
      %v263 = vshrl.u32 %v262, 7
      %v264 = vsub.s32 %v261, %v263
      %v265 = vrot.slane %v258, %v264
      %v266 = vcombine.high %v265, %v265
      %v267 = vcombine.low %v212, %v212
      %v269 = vunpack.c.l.s4 1983009808
      %v270 = vunpack.c.0.s8 %v269
      %v271 = vlaneseq
      %v272 = vshrl.u32 %v271, 7
      %v273 = vsub.s32 %v270, %v272
      %v274 = vrot.slane %v267, %v273
      %v275 = vcombine.high %v274, %v274
      %v276 = vcombine.low %v213, %v213
      %v278 = vunpack.c.l.s4 1983009808
      %v279 = vunpack.c.0.s8 %v278
      %v280 = vlaneseq
      %v281 = vshrl.u32 %v280, 7
      %v282 = vsub.s32 %v279, %v281
      %v283 = vrot.slane %v276, %v282
      %284 = vrot.lane.b32.xlu0 %v265, 127
      %v285 = vpop.permute.xlu0 %284
      %286 = vrot.lane.b32.xlu0 %v266, 127
      %v287 = vpop.permute.xlu0 %286
      %288 = vrot.lane.b32.xlu0 %v224, 127
      %v289 = vpop.permute.xlu0 %288
      %290 = vrot.lane.b32.xlu0 %v232, 127
      %v291 = vpop.permute.xlu0 %290
      %292 = vrot.lane.b32.xlu0 %v274, 127
      %v293 = vpop.permute.xlu0 %292
      %294 = vrot.lane.b32.xlu0 %v275, 127
      %v295 = vpop.permute.xlu0 %294
      %296 = vrot.lane.b32.xlu0 %v241, 127
      %v297 = vpop.permute.xlu0 %296
      %298 = vrot.lane.b32.xlu0 %v249, 127
      %v299 = vpop.permute.xlu0 %298
      %300 = vrot.lane.b32.xlu0 %v283, 127
      %v301 = vpop.permute.xlu0 %300
      %vm302 = vcmask 1039360
      %v303 = vsel %vm302, %v285, %v287
      %v304 = vsel %vm302, %v287, %v289
      %v305 = vsel %vm302, %v289, %v291
      %v306 = vsel %vm302, %v291, %v293
      %v307 = vsel %vm302, %v293, %v295
      %v308 = vsel %vm302, %v295, %v297
      %v309 = vsel %vm302, %v297, %v299
      %v310 = vsel %vm302, %v299, %v301
      %v311 = vcombine.low %v224, %v224
      %v312 = vcombine.low %v231, %v231
      %v313 = vcombine.low %v241, %v241
      %v314 = vcombine.low %v248, %v248
      %v315 = vcombine.low %v257, %v257
      %316 = vrot.lane.b32.xlu0 %v311, 126
      %v317 = vpop.permute.xlu0 %316
      %318 = vrot.lane.b32.xlu0 %v224, 126
      %v319 = vpop.permute.xlu0 %318
      %320 = vrot.lane.b32.xlu0 %v312, 126
      %v321 = vpop.permute.xlu0 %320
      %322 = vrot.lane.b32.xlu0 %v231, 126
      %v323 = vpop.permute.xlu0 %322
      %324 = vrot.lane.b32.xlu0 %v313, 126
      %v325 = vpop.permute.xlu0 %324
      %326 = vrot.lane.b32.xlu0 %v241, 126
      %v327 = vpop.permute.xlu0 %326
      %328 = vrot.lane.b32.xlu0 %v314, 126
      %v329 = vpop.permute.xlu0 %328
      %330 = vrot.lane.b32.xlu0 %v248, 126
      %v331 = vpop.permute.xlu0 %330
      %332 = vrot.lane.b32.xlu0 %v315, 126
      %v333 = vpop.permute.xlu0 %332
      %vm334 = vcmask 1031168
      %v335 = vsel %vm334, %v317, %v319
      %v336 = vsel %vm334, %v319, %v321
      %v337 = vsel %vm334, %v321, %v323
      %v338 = vsel %vm334, %v323, %v325
      %v339 = vsel %vm334, %v325, %v327
      %v340 = vsel %vm334, %v327, %v329
      %v341 = vsel %vm334, %v329, %v331
      %v342 = vsel %vm334, %v331, %v333
      %vm343 = vcmask 1041408
      %v346 = vsel %vm343, %v224, %v303
      %v349 = vsel %vm343, %v232, %v304
      %v352 = vsel %vm343, %v231, %v305
      %v355 = vsel %vm343, %v233, %v306
      %v358 = vsel %vm343, %v241, %v307
      %v361 = vsel %vm343, %v249, %v308
      %v364 = vsel %vm343, %v248, %v309
      %v367 = vsel %vm343, %v250, %v310
      %v370 = vsel %vm343, %v257, %v301
      %vm371 = vcmask 1043456
      %v373 = vsel %vm371, %v346, %v335
      %v375 = vsel %vm371, %v349, %v336
      %v377 = vsel %vm371, %v352, %v337
      %v379 = vsel %vm371, %v355, %v338
      %v381 = vsel %vm371, %v358, %v339
      %v383 = vsel %vm371, %v361, %v340
      %v385 = vsel %vm371, %v364, %v341
      %v387 = vsel %vm371, %v367, %v342
      %v389 = vsel %vm371, %v370, %v333
      %v390 = vld [vmem:[%s1] sm:$0xf]
      %s391 = scalar_lea.vmem %s1, 4
      %v392 = vld [vmem:[%s391] sm:$0xf]
      %402 = vrot.lane.b32.xlu0 %v373, 94
      %v403 = vpop.permute.xlu0 %402
      %404 = vrot.lane.b32.xlu0 %v375, 94
      %v405 = vpop.permute.xlu0 %404
      %406 = vrot.lane.b32.xlu0 %v377, 94
      %v407 = vpop.permute.xlu0 %406
      %408 = vrot.lane.b32.xlu0 %v379, 94
      %v409 = vpop.permute.xlu0 %408
      %410 = vrot.lane.b32.xlu0 %v381, 94
      %v411 = vpop.permute.xlu0 %410
      %412 = vrot.lane.b32.xlu0 %v383, 94
      %v413 = vpop.permute.xlu0 %412
      %414 = vrot.lane.b32.xlu0 %v385, 94
      %v415 = vpop.permute.xlu0 %414
      %416 = vrot.lane.b32.xlu0 %v387, 94
      %v417 = vpop.permute.xlu0 %416
      %418 = vrot.lane.b32.xlu0 %v389, 94
      %v419 = vpop.permute.xlu0 %418
      %vm420 = vcmask 769024
      %v421 = vsel %vm420, %v403, %v405
      %v422 = vsel %vm420, %v405, %v407
      %v423 = vsel %vm420, %v407, %v409
      %v424 = vsel %vm420, %v409, %v411
      %v425 = vsel %vm420, %v411, %v413
      %v426 = vsel %vm420, %v413, %v415
      %v427 = vsel %vm420, %v415, %v417
      %v428 = vsel %vm420, %v417, %v419
      %vm429 = vcmask 97280
      %v431 = vsel %vm429, %v392, 0
      %vm433 = vcmask 1045504
      %v435 = vsel %vm433, %v421, 0
      %v438 = vsel %vm433, %v422, 0
      %v441 = vsel %vm433, %v423, 0
      %v444 = vsel %vm433, %v424, 0
      %v447 = vsel %vm433, %v425, 0
      %v450 = vsel %vm433, %v426, 0
      %v453 = vsel %vm433, %v427, 0
      %v456 = vsel %vm433, %v428, 0
      %v459 = vsel %vm433, %v419, 0
      %461 = vmatprep.subr.bf16.mxu0 %v438
      %462 = vmatpush1.bf16.msra.mxu0 %v435
      %463 = vmatprep.subr.bf16.mxu0 0
      %464 = vmatpush1.bf16.msra.mxu0 0
      %465 = vmatprep.subr.bf16.mxu0 0
      %466 = vmatpush1.bf16.msra.mxu0 0
      %467 = vmatprep.subr.bf16.mxu0 0
      %468 = vmatpush1.bf16.msra.mxu0 0
      %469 = vmatprep.subr.bf16.mxu0 0
      %470 = vmatpush1.bf16.msra.mxu0 0
      %471 = vmatprep.subr.bf16.mxu0 0
      %472 = vmatpush1.bf16.msra.mxu0 0
      %473 = vmatprep.subr.bf16.mxu0 0
      %474 = vmatpush1.bf16.msra.mxu0 0
      %475 = vmatprep.subr.bf16.mxu0 0
      %476 = vmatpush1.bf16.msra.mxu0 0
      %477 = vmatprep.subr.bf16.mxu0 0
      %478 = vmatpush1.bf16.msra.mxu0 0
      %479 = vmatprep.subr.bf16.mxu0 0
      %480 = vmatpush1.bf16.msra.mxu0 0
      %481 = vmatprep.subr.bf16.mxu0 0
      %482 = vmatpush1.bf16.msra.mxu0 0
      %483 = vmatprep.subr.bf16.mxu0 0
      %484 = vmatpush1.bf16.msra.mxu0 0
      %485 = vmatprep.subr.bf16.mxu0 0
      %486 = vmatpush1.bf16.msra.mxu0 0
      %487 = vmatprep.subr.bf16.mxu0 0
      %488 = vmatpush1.bf16.msra.mxu0 0
      %489 = vmatprep.subr.bf16.mxu0 0
      %490 = vmatpush1.bf16.msra.mxu0 0
      %491 = vmatprep.subr.bf16.mxu0 0
      %492 = vmatpush1.bf16.msra.mxu0 0
      %493 = vmatprep.mubr.bf16.mxu0 0
      %494 = vmatmul.mubr.bf16.gmra.mrb[0].mxu0 %v431
      %v495 = vpop.f32.mrb[0].mxu0
      %v496 = vadd.f32 0.0, %v495
      %v497 = vpop.f32.mrb[0].mxu0
      %v498 = vadd.f32 0.0, %v497
      %v499 = vpop.f32.mrb[0].mxu0
      %v500 = vpop.f32.mrb[0].mxu0
      %501 = vdwg.mxu0
      %502 = vmatprep.subr.bf16.mxu0 %v444
      %503 = vmatpush1.bf16.msra.mxu0 %v441
      %504 = vmatprep.subr.bf16.mxu0 0
      %505 = vmatpush1.bf16.msra.mxu0 0
      %506 = vmatprep.subr.bf16.mxu0 0
      %507 = vmatpush1.bf16.msra.mxu0 0
      %508 = vmatprep.subr.bf16.mxu0 0
      %509 = vmatpush1.bf16.msra.mxu0 0
      %510 = vmatprep.subr.bf16.mxu0 0
      %511 = vmatpush1.bf16.msra.mxu0 0
      %512 = vmatprep.subr.bf16.mxu0 0
      %513 = vmatpush1.bf16.msra.mxu0 0
      %514 = vmatprep.subr.bf16.mxu0 0
      %515 = vmatpush1.bf16.msra.mxu0 0
      %516 = vmatprep.subr.bf16.mxu0 0
      %517 = vmatpush1.bf16.msra.mxu0 0
      %518 = vmatprep.subr.bf16.mxu0 0
      %519 = vmatpush1.bf16.msra.mxu0 0
      %520 = vmatprep.subr.bf16.mxu0 0
      %521 = vmatpush1.bf16.msra.mxu0 0
      %522 = vmatprep.subr.bf16.mxu0 0
      %523 = vmatpush1.bf16.msra.mxu0 0
      %524 = vmatprep.subr.bf16.mxu0 0
      %525 = vmatpush1.bf16.msra.mxu0 0
      %526 = vmatprep.subr.bf16.mxu0 0
      %527 = vmatpush1.bf16.msra.mxu0 0
      %528 = vmatprep.subr.bf16.mxu0 0
      %529 = vmatpush1.bf16.msra.mxu0 0
      %530 = vmatprep.subr.bf16.mxu0 0
      %531 = vmatpush1.bf16.msra.mxu0 0
      %532 = vmatprep.subr.bf16.mxu0 0
      %533 = vmatpush1.bf16.msra.mxu0 0
      %534 = vmatprep.mubr.bf16.mxu0 0
      %535 = vmatmul.mubr.bf16.gmra.mrb[0].mxu0 %v431
      %v536 = vpop.f32.mrb[0].mxu0
      %v537 = vadd.f32 0.0, %v536
      %v538 = vpop.f32.mrb[0].mxu0
      %v539 = vadd.f32 0.0, %v538
      %v540 = vpop.f32.mrb[0].mxu0
      %v541 = vpop.f32.mrb[0].mxu0
      %542 = vdwg.mxu0
      %543 = vmatprep.subr.bf16.mxu0 %v450
      %544 = vmatpush1.bf16.msra.mxu0 %v447
      %545 = vmatprep.subr.bf16.mxu0 0
      %546 = vmatpush1.bf16.msra.mxu0 0
      %547 = vmatprep.subr.bf16.mxu0 0
      %548 = vmatpush1.bf16.msra.mxu0 0
      %549 = vmatprep.subr.bf16.mxu0 0
      %550 = vmatpush1.bf16.msra.mxu0 0
      %551 = vmatprep.subr.bf16.mxu0 0
      %552 = vmatpush1.bf16.msra.mxu0 0
      %553 = vmatprep.subr.bf16.mxu0 0
      %554 = vmatpush1.bf16.msra.mxu0 0
      %555 = vmatprep.subr.bf16.mxu0 0
      %556 = vmatpush1.bf16.msra.mxu0 0
      %557 = vmatprep.subr.bf16.mxu0 0
      %558 = vmatpush1.bf16.msra.mxu0 0
      %559 = vmatprep.subr.bf16.mxu0 0
      %560 = vmatpush1.bf16.msra.mxu0 0
      %561 = vmatprep.subr.bf16.mxu0 0
      %562 = vmatpush1.bf16.msra.mxu0 0
      %563 = vmatprep.subr.bf16.mxu0 0
      %564 = vmatpush1.bf16.msra.mxu0 0
      %565 = vmatprep.subr.bf16.mxu0 0
      %566 = vmatpush1.bf16.msra.mxu0 0
      %567 = vmatprep.subr.bf16.mxu0 0
      %568 = vmatpush1.bf16.msra.mxu0 0
      %569 = vmatprep.subr.bf16.mxu0 0
      %570 = vmatpush1.bf16.msra.mxu0 0
      %571 = vmatprep.subr.bf16.mxu0 0
      %572 = vmatpush1.bf16.msra.mxu0 0
      %573 = vmatprep.subr.bf16.mxu0 0
      %574 = vmatpush1.bf16.msra.mxu0 0
      %575 = vmatprep.mubr.bf16.mxu0 0
      %576 = vmatmul.mubr.bf16.gmra.mrb[0].mxu0 %v431
      %v577 = vpop.f32.mrb[0].mxu0
      %v578 = vadd.f32 0.0, %v577
      %v579 = vpop.f32.mrb[0].mxu0
      %v580 = vadd.f32 0.0, %v579
      %v581 = vpop.f32.mrb[0].mxu0
      %v582 = vpop.f32.mrb[0].mxu0
      %583 = vdwg.mxu0
      %584 = vmatprep.subr.bf16.mxu0 %v456
      %585 = vmatpush1.bf16.msra.mxu0 %v453
      %586 = vmatprep.subr.bf16.mxu0 0
      %587 = vmatpush1.bf16.msra.mxu0 0
      %588 = vmatprep.subr.bf16.mxu0 0
      %589 = vmatpush1.bf16.msra.mxu0 0
      %590 = vmatprep.subr.bf16.mxu0 0
      %591 = vmatpush1.bf16.msra.mxu0 0
      %592 = vmatprep.subr.bf16.mxu0 0
      %593 = vmatpush1.bf16.msra.mxu0 0
      %594 = vmatprep.subr.bf16.mxu0 0
      %595 = vmatpush1.bf16.msra.mxu0 0
      %596 = vmatprep.subr.bf16.mxu0 0
      %597 = vmatpush1.bf16.msra.mxu0 0
      %598 = vmatprep.subr.bf16.mxu0 0
      %599 = vmatpush1.bf16.msra.mxu0 0
      %600 = vmatprep.subr.bf16.mxu0 0
      %601 = vmatpush1.bf16.msra.mxu0 0
      %602 = vmatprep.subr.bf16.mxu0 0
      %603 = vmatpush1.bf16.msra.mxu0 0
      %604 = vmatprep.subr.bf16.mxu0 0
      %605 = vmatpush1.bf16.msra.mxu0 0
      %606 = vmatprep.subr.bf16.mxu0 0
      %607 = vmatpush1.bf16.msra.mxu0 0
      %608 = vmatprep.subr.bf16.mxu0 0
      %609 = vmatpush1.bf16.msra.mxu0 0
      %610 = vmatprep.subr.bf16.mxu0 0
      %611 = vmatpush1.bf16.msra.mxu0 0
      %612 = vmatprep.subr.bf16.mxu0 0
      %613 = vmatpush1.bf16.msra.mxu0 0
      %614 = vmatprep.subr.bf16.mxu0 0
      %615 = vmatpush1.bf16.msra.mxu0 0
      %616 = vmatprep.mubr.bf16.mxu0 0
      %617 = vmatmul.mubr.bf16.gmra.mrb[0].mxu0 %v431
      %v618 = vpop.f32.mrb[0].mxu0
      %v619 = vadd.f32 0.0, %v618
      %v620 = vpop.f32.mrb[0].mxu0
      %v621 = vadd.f32 0.0, %v620
      %v622 = vpop.f32.mrb[0].mxu0
      %v623 = vpop.f32.mrb[0].mxu0
      %624 = vdwg.mxu0
      %625 = vmatprep.subr.bf16.mxu0 0
      %626 = vmatpush1.bf16.msra.mxu0 %v459
      %627 = vmatprep.subr.bf16.mxu0 0
      %628 = vmatpush1.bf16.msra.mxu0 0
      %629 = vmatprep.subr.bf16.mxu0 0
      %630 = vmatpush1.bf16.msra.mxu0 0
      %631 = vmatprep.subr.bf16.mxu0 0
      %632 = vmatpush1.bf16.msra.mxu0 0
      %633 = vmatprep.subr.bf16.mxu0 0
      %634 = vmatpush1.bf16.msra.mxu0 0
      %635 = vmatprep.subr.bf16.mxu0 0
      %636 = vmatpush1.bf16.msra.mxu0 0
      %637 = vmatprep.subr.bf16.mxu0 0
      %638 = vmatpush1.bf16.msra.mxu0 0
      %639 = vmatprep.subr.bf16.mxu0 0
      %640 = vmatpush1.bf16.msra.mxu0 0
      %641 = vmatprep.subr.bf16.mxu0 0
      %642 = vmatpush1.bf16.msra.mxu0 0
      %643 = vmatprep.subr.bf16.mxu0 0
      %644 = vmatpush1.bf16.msra.mxu0 0
      %645 = vmatprep.subr.bf16.mxu0 0
      %646 = vmatpush1.bf16.msra.mxu0 0
      %647 = vmatprep.subr.bf16.mxu0 0
      %648 = vmatpush1.bf16.msra.mxu0 0
      %649 = vmatprep.subr.bf16.mxu0 0
      %650 = vmatpush1.bf16.msra.mxu0 0
      %651 = vmatprep.subr.bf16.mxu0 0
      %652 = vmatpush1.bf16.msra.mxu0 0
      %653 = vmatprep.subr.bf16.mxu0 0
      %654 = vmatpush1.bf16.msra.mxu0 0
      %655 = vmatprep.subr.bf16.mxu0 0
      %656 = vmatpush1.bf16.msra.mxu0 0
      %657 = vmatprep.mubr.bf16.mxu0 0
      %658 = vmatmul.mubr.bf16.gmra.mrb[0].mxu0 %v431
      %v659 = vpop.f32.mrb[0].mxu0
      %v660 = vadd.f32 0.0, %v659
      %v661 = vpop.f32.mrb[0].mxu0
      %v662 = vpop.f32.mrb[0].mxu0
      %v663 = vpop.f32.mrb[0].mxu0
      %664 = vdwg.mxu0
      %v666 = vsel %vm429, %v390, 0
      %v668 = vsel %vm433, %v373, 0
      %v670 = vsel %vm433, %v375, 0
      %v672 = vsel %vm433, %v377, 0
      %v674 = vsel %vm433, %v379, 0
      %v676 = vsel %vm433, %v381, 0
      %v678 = vsel %vm433, %v383, 0
      %v680 = vsel %vm433, %v385, 0
      %v682 = vsel %vm433, %v387, 0
      %v684 = vsel %vm433, %v389, 0
      %686 = vmatprep.subr.bf16.mxu0 %v670
      %687 = vmatpush1.bf16.msra.mxu0 %v668
      %688 = vmatprep.subr.bf16.mxu0 0
      %689 = vmatpush1.bf16.msra.mxu0 0
      %690 = vmatprep.subr.bf16.mxu0 0
      %691 = vmatpush1.bf16.msra.mxu0 0
      %692 = vmatprep.subr.bf16.mxu0 0
      %693 = vmatpush1.bf16.msra.mxu0 0
      %694 = vmatprep.subr.bf16.mxu0 0
      %695 = vmatpush1.bf16.msra.mxu0 0
      %696 = vmatprep.subr.bf16.mxu0 0
      %697 = vmatpush1.bf16.msra.mxu0 0
      %698 = vmatprep.subr.bf16.mxu0 0
      %699 = vmatpush1.bf16.msra.mxu0 0
      %700 = vmatprep.subr.bf16.mxu0 0
      %701 = vmatpush1.bf16.msra.mxu0 0
      %702 = vmatprep.subr.bf16.mxu0 0
      %703 = vmatpush1.bf16.msra.mxu0 0
      %704 = vmatprep.subr.bf16.mxu0 0
      %705 = vmatpush1.bf16.msra.mxu0 0
      %706 = vmatprep.subr.bf16.mxu0 0
      %707 = vmatpush1.bf16.msra.mxu0 0
      %708 = vmatprep.subr.bf16.mxu0 0
      %709 = vmatpush1.bf16.msra.mxu0 0
      %710 = vmatprep.subr.bf16.mxu0 0
      %711 = vmatpush1.bf16.msra.mxu0 0
      %712 = vmatprep.subr.bf16.mxu0 0
      %713 = vmatpush1.bf16.msra.mxu0 0
      %714 = vmatprep.subr.bf16.mxu0 0
      %715 = vmatpush1.bf16.msra.mxu0 0
      %716 = vmatprep.subr.bf16.mxu0 0
      %717 = vmatpush1.bf16.msra.mxu0 0
      %718 = vmatprep.mubr.bf16.mxu0 0
      %719 = vmatmul.mubr.bf16.gmra.mrb[0].mxu0 %v666
      %v720 = vpop.f32.mrb[0].mxu0
      %v721 = vadd.f32 %v496, %v720
      %v722 = vpop.f32.mrb[0].mxu0
      %v723 = vadd.f32 %v498, %v722
      %v724 = vpop.f32.mrb[0].mxu0
      %v725 = vpop.f32.mrb[0].mxu0
      %726 = vdwg.mxu0
      %727 = vmatprep.subr.bf16.mxu0 %v674
      %728 = vmatpush1.bf16.msra.mxu0 %v672
      %729 = vmatprep.subr.bf16.mxu0 0
      %730 = vmatpush1.bf16.msra.mxu0 0
      %731 = vmatprep.subr.bf16.mxu0 0
      %732 = vmatpush1.bf16.msra.mxu0 0
      %733 = vmatprep.subr.bf16.mxu0 0
      %734 = vmatpush1.bf16.msra.mxu0 0
      %735 = vmatprep.subr.bf16.mxu0 0
      %736 = vmatpush1.bf16.msra.mxu0 0
      %737 = vmatprep.subr.bf16.mxu0 0
      %738 = vmatpush1.bf16.msra.mxu0 0
      %739 = vmatprep.subr.bf16.mxu0 0
      %740 = vmatpush1.bf16.msra.mxu0 0
      %741 = vmatprep.subr.bf16.mxu0 0
      %742 = vmatpush1.bf16.msra.mxu0 0
      %743 = vmatprep.subr.bf16.mxu0 0
      %744 = vmatpush1.bf16.msra.mxu0 0
      %745 = vmatprep.subr.bf16.mxu0 0
      %746 = vmatpush1.bf16.msra.mxu0 0
      %747 = vmatprep.subr.bf16.mxu0 0
      %748 = vmatpush1.bf16.msra.mxu0 0
      %749 = vmatprep.subr.bf16.mxu0 0
      %750 = vmatpush1.bf16.msra.mxu0 0
      %751 = vmatprep.subr.bf16.mxu0 0
      %752 = vmatpush1.bf16.msra.mxu0 0
      %753 = vmatprep.subr.bf16.mxu0 0
      %754 = vmatpush1.bf16.msra.mxu0 0
      %755 = vmatprep.subr.bf16.mxu0 0
      %756 = vmatpush1.bf16.msra.mxu0 0
      %757 = vmatprep.subr.bf16.mxu0 0
      %758 = vmatpush1.bf16.msra.mxu0 0
      %759 = vmatprep.mubr.bf16.mxu0 0
      %760 = vmatmul.mubr.bf16.gmra.mrb[0].mxu0 %v666
      %v761 = vpop.f32.mrb[0].mxu0
      %v762 = vadd.f32 %v537, %v761
      %v763 = vpop.f32.mrb[0].mxu0
      %v764 = vadd.f32 %v539, %v763
      %v765 = vpop.f32.mrb[0].mxu0
      %v766 = vpop.f32.mrb[0].mxu0
      %767 = vdwg.mxu0
      %768 = vmatprep.subr.bf16.mxu0 %v678
      %769 = vmatpush1.bf16.msra.mxu0 %v676
      %770 = vmatprep.subr.bf16.mxu0 0
      %771 = vmatpush1.bf16.msra.mxu0 0
      %772 = vmatprep.subr.bf16.mxu0 0
      %773 = vmatpush1.bf16.msra.mxu0 0
      %774 = vmatprep.subr.bf16.mxu0 0
      %775 = vmatpush1.bf16.msra.mxu0 0
      %776 = vmatprep.subr.bf16.mxu0 0
      %777 = vmatpush1.bf16.msra.mxu0 0
      %778 = vmatprep.subr.bf16.mxu0 0
      %779 = vmatpush1.bf16.msra.mxu0 0
      %780 = vmatprep.subr.bf16.mxu0 0
      %781 = vmatpush1.bf16.msra.mxu0 0
      %782 = vmatprep.subr.bf16.mxu0 0
      %783 = vmatpush1.bf16.msra.mxu0 0
      %784 = vmatprep.subr.bf16.mxu0 0
      %785 = vmatpush1.bf16.msra.mxu0 0
      %786 = vmatprep.subr.bf16.mxu0 0
      %787 = vmatpush1.bf16.msra.mxu0 0
      %788 = vmatprep.subr.bf16.mxu0 0
      %789 = vmatpush1.bf16.msra.mxu0 0
      %790 = vmatprep.subr.bf16.mxu0 0
      %791 = vmatpush1.bf16.msra.mxu0 0
      %792 = vmatprep.subr.bf16.mxu0 0
      %793 = vmatpush1.bf16.msra.mxu0 0
      %794 = vmatprep.subr.bf16.mxu0 0
      %795 = vmatpush1.bf16.msra.mxu0 0
      %796 = vmatprep.subr.bf16.mxu0 0
      %797 = vmatpush1.bf16.msra.mxu0 0
      %798 = vmatprep.subr.bf16.mxu0 0
      %799 = vmatpush1.bf16.msra.mxu0 0
      %800 = vmatprep.mubr.bf16.mxu0 0
      %801 = vmatmul.mubr.bf16.gmra.mrb[0].mxu0 %v666
      %v802 = vpop.f32.mrb[0].mxu0
      %v803 = vadd.f32 %v578, %v802
      %v804 = vpop.f32.mrb[0].mxu0
      %v805 = vadd.f32 %v580, %v804
      %v806 = vpop.f32.mrb[0].mxu0
      %v807 = vpop.f32.mrb[0].mxu0
      %808 = vdwg.mxu0
      %809 = vmatprep.subr.bf16.mxu0 %v682
      %810 = vmatpush1.bf16.msra.mxu0 %v680
      %811 = vmatprep.subr.bf16.mxu0 0
      %812 = vmatpush1.bf16.msra.mxu0 0
      %813 = vmatprep.subr.bf16.mxu0 0
      %814 = vmatpush1.bf16.msra.mxu0 0
      %815 = vmatprep.subr.bf16.mxu0 0
      %816 = vmatpush1.bf16.msra.mxu0 0
      %817 = vmatprep.subr.bf16.mxu0 0
      %818 = vmatpush1.bf16.msra.mxu0 0
      %819 = vmatprep.subr.bf16.mxu0 0
      %820 = vmatpush1.bf16.msra.mxu0 0
      %821 = vmatprep.subr.bf16.mxu0 0
      %822 = vmatpush1.bf16.msra.mxu0 0
      %823 = vmatprep.subr.bf16.mxu0 0
      %824 = vmatpush1.bf16.msra.mxu0 0
      %825 = vmatprep.subr.bf16.mxu0 0
      %826 = vmatpush1.bf16.msra.mxu0 0
      %827 = vmatprep.subr.bf16.mxu0 0
      %828 = vmatpush1.bf16.msra.mxu0 0
      %829 = vmatprep.subr.bf16.mxu0 0
      %830 = vmatpush1.bf16.msra.mxu0 0
      %831 = vmatprep.subr.bf16.mxu0 0
      %832 = vmatpush1.bf16.msra.mxu0 0
      %833 = vmatprep.subr.bf16.mxu0 0
      %834 = vmatpush1.bf16.msra.mxu0 0
      %835 = vmatprep.subr.bf16.mxu0 0
      %836 = vmatpush1.bf16.msra.mxu0 0
      %837 = vmatprep.subr.bf16.mxu0 0
      %838 = vmatpush1.bf16.msra.mxu0 0
      %839 = vmatprep.subr.bf16.mxu0 0
      %840 = vmatpush1.bf16.msra.mxu0 0
      %841 = vmatprep.mubr.bf16.mxu0 0
      %842 = vmatmul.mubr.bf16.gmra.mrb[0].mxu0 %v666
      %v843 = vpop.f32.mrb[0].mxu0
      %v844 = vadd.f32 %v619, %v843
      %v845 = vpop.f32.mrb[0].mxu0
      %v846 = vadd.f32 %v621, %v845
      %v847 = vpop.f32.mrb[0].mxu0
      %v848 = vpop.f32.mrb[0].mxu0
      %849 = vdwg.mxu0
      %850 = vmatprep.subr.bf16.mxu0 0
      %851 = vmatpush1.bf16.msra.mxu0 %v684
      %852 = vmatprep.subr.bf16.mxu0 0
      %853 = vmatpush1.bf16.msra.mxu0 0
      %854 = vmatprep.subr.bf16.mxu0 0
      %855 = vmatpush1.bf16.msra.mxu0 0
      %856 = vmatprep.subr.bf16.mxu0 0
      %857 = vmatpush1.bf16.msra.mxu0 0
      %858 = vmatprep.subr.bf16.mxu0 0
      %859 = vmatpush1.bf16.msra.mxu0 0
      %860 = vmatprep.subr.bf16.mxu0 0
      %861 = vmatpush1.bf16.msra.mxu0 0
      %862 = vmatprep.subr.bf16.mxu0 0
      %863 = vmatpush1.bf16.msra.mxu0 0
      %864 = vmatprep.subr.bf16.mxu0 0
      %865 = vmatpush1.bf16.msra.mxu0 0
      %866 = vmatprep.subr.bf16.mxu0 0
      %867 = vmatpush1.bf16.msra.mxu0 0
      %868 = vmatprep.subr.bf16.mxu0 0
      %869 = vmatpush1.bf16.msra.mxu0 0
      %870 = vmatprep.subr.bf16.mxu0 0
      %871 = vmatpush1.bf16.msra.mxu0 0
      %872 = vmatprep.subr.bf16.mxu0 0
      %873 = vmatpush1.bf16.msra.mxu0 0
      %874 = vmatprep.subr.bf16.mxu0 0
      %875 = vmatpush1.bf16.msra.mxu0 0
      %876 = vmatprep.subr.bf16.mxu0 0
      %877 = vmatpush1.bf16.msra.mxu0 0
      %878 = vmatprep.subr.bf16.mxu0 0
      %879 = vmatpush1.bf16.msra.mxu0 0
      %880 = vmatprep.subr.bf16.mxu0 0
      %881 = vmatpush1.bf16.msra.mxu0 0
      %882 = vmatprep.mubr.bf16.mxu0 0
      %883 = vmatmul.mubr.bf16.gmra.mrb[0].mxu0 %v666
      %v884 = vpop.f32.mrb[0].mxu0
      %v885 = vadd.f32 %v660, %v884
      %v886 = vpop.f32.mrb[0].mxu0
      %v887 = vpop.f32.mrb[0].mxu0
      %v888 = vpop.f32.mrb[0].mxu0
      %889 = vdwg.mxu0
      %v890 = vld [vmem:[%s198] sm:$0xff]
      %v891 = vld [vmem:[%s198 + $0x8] sm:$0xff]
      %v892 = vld [vmem:[%s198 + $0x10] sm:$0xf]
      %v896 = vcombine.high %v890, %v890
      %v898 = vunpack.c.l.s4 1983009808
      %v899 = vunpack.c.0.s8 %v898
      %v900 = vlaneseq
      %v901 = vshrl.u32 %v900, 7
      %v902 = vsub.s32 %v899, %v901
      %v903 = vrot.slane %v890, %v902
      %v905 = vunpack.c.l.s4 1983009808
      %v906 = vunpack.c.0.s8 %v905
      %v907 = vlaneseq
      %v908 = vshrl.u32 %v907, 7
      %v909 = vsub.s32 %v906, %v908
      %v910 = vrot.slane %v896, %v909
      %v911 = vcombine.high %v903, %v903
      %v912 = vcombine.high %v910, %v910
      %v913 = vcombine.high %v891, %v891
      %v915 = vunpack.c.l.s4 1983009808
      %v916 = vunpack.c.0.s8 %v915
      %v917 = vlaneseq
      %v918 = vshrl.u32 %v917, 7
      %v919 = vsub.s32 %v916, %v918
      %v920 = vrot.slane %v891, %v919
      %v922 = vunpack.c.l.s4 1983009808
      %v923 = vunpack.c.0.s8 %v922
      %v924 = vlaneseq
      %v925 = vshrl.u32 %v924, 7
      %v926 = vsub.s32 %v923, %v925
      %v927 = vrot.slane %v913, %v926
      %v928 = vcombine.high %v920, %v920
      %v929 = vcombine.high %v927, %v927
      %v931 = vunpack.c.l.s4 1983009808
      %v932 = vunpack.c.0.s8 %v931
      %v933 = vlaneseq
      %v934 = vshrl.u32 %v933, 7
      %v935 = vsub.s32 %v932, %v934
      %v936 = vrot.slane %v892, %v935
      %v937 = vcombine.high %v936, %v936
      %v938 = vcombine.low %v890, %v890
      %v940 = vunpack.c.l.s4 1983009808
      %v941 = vunpack.c.0.s8 %v940
      %v942 = vlaneseq
      %v943 = vshrl.u32 %v942, 7
      %v944 = vsub.s32 %v941, %v943
      %v945 = vrot.slane %v938, %v944
      %v946 = vcombine.high %v945, %v945
      %v947 = vcombine.low %v891, %v891
      %v949 = vunpack.c.l.s4 1983009808
      %v950 = vunpack.c.0.s8 %v949
      %v951 = vlaneseq
      %v952 = vshrl.u32 %v951, 7
      %v953 = vsub.s32 %v950, %v952
      %v954 = vrot.slane %v947, %v953
      %v955 = vcombine.high %v954, %v954
      %v956 = vcombine.low %v892, %v892
      %v958 = vunpack.c.l.s4 1983009808
      %v959 = vunpack.c.0.s8 %v958
      %v960 = vlaneseq
      %v961 = vshrl.u32 %v960, 7
      %v962 = vsub.s32 %v959, %v961
      %v963 = vrot.slane %v956, %v962
      %v964 = vcombine.high %v963, %v963
      %965 = vrot.lane.b32.xlu0 %v945, 127
      %v966 = vpop.permute.xlu0 %965
      %967 = vrot.lane.b32.xlu0 %v946, 127
      %v968 = vpop.permute.xlu0 %967
      %969 = vrot.lane.b32.xlu0 %v903, 127
      %v970 = vpop.permute.xlu0 %969
      %971 = vrot.lane.b32.xlu0 %v911, 127
      %v972 = vpop.permute.xlu0 %971
      %973 = vrot.lane.b32.xlu0 %v954, 127
      %v974 = vpop.permute.xlu0 %973
      %975 = vrot.lane.b32.xlu0 %v955, 127
      %v976 = vpop.permute.xlu0 %975
      %977 = vrot.lane.b32.xlu0 %v920, 127
      %v978 = vpop.permute.xlu0 %977
      %979 = vrot.lane.b32.xlu0 %v928, 127
      %v980 = vpop.permute.xlu0 %979
      %981 = vrot.lane.b32.xlu0 %v963, 127
      %v982 = vpop.permute.xlu0 %981
      %983 = vrot.lane.b32.xlu0 %v964, 127
      %v984 = vpop.permute.xlu0 %983
      %v985 = vsel %vm302, %v966, %v968
      %v986 = vsel %vm302, %v968, %v970
      %v987 = vsel %vm302, %v970, %v972
      %v988 = vsel %vm302, %v972, %v974
      %v989 = vsel %vm302, %v974, %v976
      %v990 = vsel %vm302, %v976, %v978
      %v991 = vsel %vm302, %v978, %v980
      %v992 = vsel %vm302, %v980, %v982
      %v993 = vsel %vm302, %v982, %v984
      %v994 = vcombine.low %v903, %v903
      %v995 = vcombine.low %v910, %v910
      %v996 = vcombine.low %v920, %v920
      %v997 = vcombine.low %v927, %v927
      %v998 = vcombine.low %v936, %v936
      %999 = vrot.lane.b32.xlu0 %v994, 126
      %v1000 = vpop.permute.xlu0 %999
      %1001 = vrot.lane.b32.xlu0 %v903, 126
      %v1002 = vpop.permute.xlu0 %1001
      %1003 = vrot.lane.b32.xlu0 %v995, 126
      %v1004 = vpop.permute.xlu0 %1003
      %1005 = vrot.lane.b32.xlu0 %v910, 126
      %v1006 = vpop.permute.xlu0 %1005
      %1007 = vrot.lane.b32.xlu0 %v996, 126
      %v1008 = vpop.permute.xlu0 %1007
      %1009 = vrot.lane.b32.xlu0 %v920, 126
      %v1010 = vpop.permute.xlu0 %1009
      %1011 = vrot.lane.b32.xlu0 %v997, 126
      %v1012 = vpop.permute.xlu0 %1011
      %1013 = vrot.lane.b32.xlu0 %v927, 126
      %v1014 = vpop.permute.xlu0 %1013
      %1015 = vrot.lane.b32.xlu0 %v998, 126
      %v1016 = vpop.permute.xlu0 %1015
      %1017 = vrot.lane.b32.xlu0 %v936, 126
      %v1018 = vpop.permute.xlu0 %1017
      %v1019 = vsel %vm334, %v1000, %v1002
      %v1020 = vsel %vm334, %v1002, %v1004
      %v1021 = vsel %vm334, %v1004, %v1006
      %v1022 = vsel %vm334, %v1006, %v1008
      %v1023 = vsel %vm334, %v1008, %v1010
      %v1024 = vsel %vm334, %v1010, %v1012
      %v1025 = vsel %vm334, %v1012, %v1014
      %v1026 = vsel %vm334, %v1014, %v1016
      %v1027 = vsel %vm334, %v1016, %v1018
      %v1030 = vsel %vm343, %v903, %v985
      %v1033 = vsel %vm343, %v911, %v986
      %v1036 = vsel %vm343, %v910, %v987
      %v1039 = vsel %vm343, %v912, %v988
      %v1042 = vsel %vm343, %v920, %v989
      %v1045 = vsel %vm343, %v928, %v990
      %v1048 = vsel %vm343, %v927, %v991
      %v1051 = vsel %vm343, %v929, %v992
      %v1054 = vsel %vm343, %v936, %v993
      %v1057 = vsel %vm343, %v937, %v984
      %v1059 = vsel %vm371, %v1030, %v1019
      %v1061 = vsel %vm371, %v1033, %v1020
      %v1063 = vsel %vm371, %v1036, %v1021
      %v1065 = vsel %vm371, %v1039, %v1022
      %v1067 = vsel %vm371, %v1042, %v1023
      %v1069 = vsel %vm371, %v1045, %v1024
      %v1071 = vsel %vm371, %v1048, %v1025
      %v1073 = vsel %vm371, %v1051, %v1026
      %v1075 = vsel %vm371, %v1054, %v1027
      %v1077 = vsel %vm371, %v1057, %v1018
      %s1078 = scalar_lea.vmem %s1, 8
      %v1079 = vld [vmem:[%s1078] sm:$0xf]
      %1090 = vrot.lane.b32.xlu0 %v1059, 60
      %v1091 = vpop.permute.xlu0 %1090
      %1092 = vrot.lane.b32.xlu0 %v1061, 60
      %v1093 = vpop.permute.xlu0 %1092
      %1094 = vrot.lane.b32.xlu0 %v1063, 60
      %v1095 = vpop.permute.xlu0 %1094
      %1096 = vrot.lane.b32.xlu0 %v1065, 60
      %v1097 = vpop.permute.xlu0 %1096
      %1098 = vrot.lane.b32.xlu0 %v1067, 60
      %v1099 = vpop.permute.xlu0 %1098
      %1100 = vrot.lane.b32.xlu0 %v1069, 60
      %v1101 = vpop.permute.xlu0 %1100
      %1102 = vrot.lane.b32.xlu0 %v1071, 60
      %v1103 = vpop.permute.xlu0 %1102
      %1104 = vrot.lane.b32.xlu0 %v1073, 60
      %v1105 = vpop.permute.xlu0 %1104
      %1106 = vrot.lane.b32.xlu0 %v1075, 60
      %v1107 = vpop.permute.xlu0 %1106
      %1108 = vrot.lane.b32.xlu0 %v1077, 60
      %v1109 = vpop.permute.xlu0 %1108
      %vm1110 = vcmask 490496
      %v1111 = vsel %vm1110, %v1091, %v1093
      %v1112 = vsel %vm1110, %v1093, %v1095
      %v1113 = vsel %vm1110, %v1095, %v1097
      %v1114 = vsel %vm1110, %v1097, %v1099
      %v1115 = vsel %vm1110, %v1099, %v1101
      %v1116 = vsel %vm1110, %v1101, %v1103
      %v1117 = vsel %vm1110, %v1103, %v1105
      %v1118 = vsel %vm1110, %v1105, %v1107
      %v1119 = vsel %vm1110, %v1107, %v1109
      %v1121 = vsel %vm429, %v1079, 0
      %v1124 = vsel %vm433, %v1111, 0
      %v1127 = vsel %vm433, %v1112, 0
      %v1130 = vsel %vm433, %v1113, 0
      %v1133 = vsel %vm433, %v1114, 0
      %v1136 = vsel %vm433, %v1115, 0
      %v1139 = vsel %vm433, %v1116, 0
      %v1142 = vsel %vm433, %v1117, 0
      %v1145 = vsel %vm433, %v1118, 0
      %v1148 = vsel %vm433, %v1119, 0
      %1150 = vmatprep.subr.bf16.mxu0 %v1127
      %1151 = vmatpush1.bf16.msra.mxu0 %v1124
      %1152 = vmatprep.subr.bf16.mxu0 0
      %1153 = vmatpush1.bf16.msra.mxu0 0
      %1154 = vmatprep.subr.bf16.mxu0 0
      %1155 = vmatpush1.bf16.msra.mxu0 0
      %1156 = vmatprep.subr.bf16.mxu0 0
      %1157 = vmatpush1.bf16.msra.mxu0 0
      %1158 = vmatprep.subr.bf16.mxu0 0
      %1159 = vmatpush1.bf16.msra.mxu0 0
      %1160 = vmatprep.subr.bf16.mxu0 0
      %1161 = vmatpush1.bf16.msra.mxu0 0
      %1162 = vmatprep.subr.bf16.mxu0 0
      %1163 = vmatpush1.bf16.msra.mxu0 0
      %1164 = vmatprep.subr.bf16.mxu0 0
      %1165 = vmatpush1.bf16.msra.mxu0 0
      %1166 = vmatprep.subr.bf16.mxu0 0
      %1167 = vmatpush1.bf16.msra.mxu0 0
      %1168 = vmatprep.subr.bf16.mxu0 0
      %1169 = vmatpush1.bf16.msra.mxu0 0
      %1170 = vmatprep.subr.bf16.mxu0 0
      %1171 = vmatpush1.bf16.msra.mxu0 0
      %1172 = vmatprep.subr.bf16.mxu0 0
      %1173 = vmatpush1.bf16.msra.mxu0 0
      %1174 = vmatprep.subr.bf16.mxu0 0
      %1175 = vmatpush1.bf16.msra.mxu0 0
      %1176 = vmatprep.subr.bf16.mxu0 0
      %1177 = vmatpush1.bf16.msra.mxu0 0
      %1178 = vmatprep.subr.bf16.mxu0 0
      %1179 = vmatpush1.bf16.msra.mxu0 0
      %1180 = vmatprep.subr.bf16.mxu0 0
      %1181 = vmatpush1.bf16.msra.mxu0 0
      %1182 = vmatprep.mubr.bf16.mxu0 0
      %1183 = vmatmul.mubr.bf16.gmra.mrb[0].mxu0 %v1121
      %v1184 = vpop.f32.mrb[0].mxu0
      %v1185 = vadd.f32 0.0, %v1184
      %v1186 = vpop.f32.mrb[0].mxu0
      %v1187 = vadd.f32 0.0, %v1186
      %v1188 = vpop.f32.mrb[0].mxu0
      %v1189 = vpop.f32.mrb[0].mxu0
      %1190 = vdwg.mxu0
      %1191 = vmatprep.subr.bf16.mxu0 %v1133
      %1192 = vmatpush1.bf16.msra.mxu0 %v1130
      %1193 = vmatprep.subr.bf16.mxu0 0
      %1194 = vmatpush1.bf16.msra.mxu0 0
      %1195 = vmatprep.subr.bf16.mxu0 0
      %1196 = vmatpush1.bf16.msra.mxu0 0
      %1197 = vmatprep.subr.bf16.mxu0 0
      %1198 = vmatpush1.bf16.msra.mxu0 0
      %1199 = vmatprep.subr.bf16.mxu0 0
      %1200 = vmatpush1.bf16.msra.mxu0 0
      %1201 = vmatprep.subr.bf16.mxu0 0
      %1202 = vmatpush1.bf16.msra.mxu0 0
      %1203 = vmatprep.subr.bf16.mxu0 0
      %1204 = vmatpush1.bf16.msra.mxu0 0
      %1205 = vmatprep.subr.bf16.mxu0 0
      %1206 = vmatpush1.bf16.msra.mxu0 0
      %1207 = vmatprep.subr.bf16.mxu0 0
      %1208 = vmatpush1.bf16.msra.mxu0 0
      %1209 = vmatprep.subr.bf16.mxu0 0
      %1210 = vmatpush1.bf16.msra.mxu0 0
      %1211 = vmatprep.subr.bf16.mxu0 0
      %1212 = vmatpush1.bf16.msra.mxu0 0
      %1213 = vmatprep.subr.bf16.mxu0 0
      %1214 = vmatpush1.bf16.msra.mxu0 0
      %1215 = vmatprep.subr.bf16.mxu0 0
      %1216 = vmatpush1.bf16.msra.mxu0 0
      %1217 = vmatprep.subr.bf16.mxu0 0
      %1218 = vmatpush1.bf16.msra.mxu0 0
      %1219 = vmatprep.subr.bf16.mxu0 0
      %1220 = vmatpush1.bf16.msra.mxu0 0
      %1221 = vmatprep.subr.bf16.mxu0 0
      %1222 = vmatpush1.bf16.msra.mxu0 0
      %1223 = vmatprep.mubr.bf16.mxu0 0
      %1224 = vmatmul.mubr.bf16.gmra.mrb[0].mxu0 %v1121
      %v1225 = vpop.f32.mrb[0].mxu0
      %v1226 = vadd.f32 0.0, %v1225
      %v1227 = vpop.f32.mrb[0].mxu0
      %v1228 = vadd.f32 0.0, %v1227
      %v1229 = vpop.f32.mrb[0].mxu0
      %v1230 = vpop.f32.mrb[0].mxu0
      %1231 = vdwg.mxu0
      %1232 = vmatprep.subr.bf16.mxu0 %v1139
      %1233 = vmatpush1.bf16.msra.mxu0 %v1136
      %1234 = vmatprep.subr.bf16.mxu0 0
      %1235 = vmatpush1.bf16.msra.mxu0 0
      %1236 = vmatprep.subr.bf16.mxu0 0
      %1237 = vmatpush1.bf16.msra.mxu0 0
      %1238 = vmatprep.subr.bf16.mxu0 0
      %1239 = vmatpush1.bf16.msra.mxu0 0
      %1240 = vmatprep.subr.bf16.mxu0 0
      %1241 = vmatpush1.bf16.msra.mxu0 0
      %1242 = vmatprep.subr.bf16.mxu0 0
      %1243 = vmatpush1.bf16.msra.mxu0 0
      %1244 = vmatprep.subr.bf16.mxu0 0
      %1245 = vmatpush1.bf16.msra.mxu0 0
      %1246 = vmatprep.subr.bf16.mxu0 0
      %1247 = vmatpush1.bf16.msra.mxu0 0
      %1248 = vmatprep.subr.bf16.mxu0 0
      %1249 = vmatpush1.bf16.msra.mxu0 0
      %1250 = vmatprep.subr.bf16.mxu0 0
      %1251 = vmatpush1.bf16.msra.mxu0 0
      %1252 = vmatprep.subr.bf16.mxu0 0
      %1253 = vmatpush1.bf16.msra.mxu0 0
      %1254 = vmatprep.subr.bf16.mxu0 0
      %1255 = vmatpush1.bf16.msra.mxu0 0
      %1256 = vmatprep.subr.bf16.mxu0 0
      %1257 = vmatpush1.bf16.msra.mxu0 0
      %1258 = vmatprep.subr.bf16.mxu0 0
      %1259 = vmatpush1.bf16.msra.mxu0 0
      %1260 = vmatprep.subr.bf16.mxu0 0
      %1261 = vmatpush1.bf16.msra.mxu0 0
      %1262 = vmatprep.subr.bf16.mxu0 0
      %1263 = vmatpush1.bf16.msra.mxu0 0
      %1264 = vmatprep.mubr.bf16.mxu0 0
      %1265 = vmatmul.mubr.bf16.gmra.mrb[0].mxu0 %v1121
      %v1266 = vpop.f32.mrb[0].mxu0
      %v1267 = vadd.f32 0.0, %v1266
      %v1268 = vpop.f32.mrb[0].mxu0
      %v1269 = vadd.f32 0.0, %v1268
      %v1270 = vpop.f32.mrb[0].mxu0
      %v1271 = vpop.f32.mrb[0].mxu0
      %1272 = vdwg.mxu0
      %1273 = vmatprep.subr.bf16.mxu0 %v1145
      %1274 = vmatpush1.bf16.msra.mxu0 %v1142
      %1275 = vmatprep.subr.bf16.mxu0 0
      %1276 = vmatpush1.bf16.msra.mxu0 0
      %1277 = vmatprep.subr.bf16.mxu0 0
      %1278 = vmatpush1.bf16.msra.mxu0 0
      %1279 = vmatprep.subr.bf16.mxu0 0
      %1280 = vmatpush1.bf16.msra.mxu0 0
      %1281 = vmatprep.subr.bf16.mxu0 0
      %1282 = vmatpush1.bf16.msra.mxu0 0
      %1283 = vmatprep.subr.bf16.mxu0 0
      %1284 = vmatpush1.bf16.msra.mxu0 0
      %1285 = vmatprep.subr.bf16.mxu0 0
      %1286 = vmatpush1.bf16.msra.mxu0 0
      %1287 = vmatprep.subr.bf16.mxu0 0
      %1288 = vmatpush1.bf16.msra.mxu0 0
      %1289 = vmatprep.subr.bf16.mxu0 0
      %1290 = vmatpush1.bf16.msra.mxu0 0
      %1291 = vmatprep.subr.bf16.mxu0 0
      %1292 = vmatpush1.bf16.msra.mxu0 0
      %1293 = vmatprep.subr.bf16.mxu0 0
      %1294 = vmatpush1.bf16.msra.mxu0 0
      %1295 = vmatprep.subr.bf16.mxu0 0
      %1296 = vmatpush1.bf16.msra.mxu0 0
      %1297 = vmatprep.subr.bf16.mxu0 0
      %1298 = vmatpush1.bf16.msra.mxu0 0
      %1299 = vmatprep.subr.bf16.mxu0 0
      %1300 = vmatpush1.bf16.msra.mxu0 0
      %1301 = vmatprep.subr.bf16.mxu0 0
      %1302 = vmatpush1.bf16.msra.mxu0 0
      %1303 = vmatprep.subr.bf16.mxu0 0
      %1304 = vmatpush1.bf16.msra.mxu0 0
      %1305 = vmatprep.mubr.bf16.mxu0 0
      %1306 = vmatmul.mubr.bf16.gmra.mrb[0].mxu0 %v1121
      %v1307 = vpop.f32.mrb[0].mxu0
      %v1308 = vadd.f32 0.0, %v1307
      %v1309 = vpop.f32.mrb[0].mxu0
      %v1310 = vadd.f32 0.0, %v1309
      %v1311 = vpop.f32.mrb[0].mxu0
      %v1312 = vpop.f32.mrb[0].mxu0
      %1313 = vdwg.mxu0
      %1314 = vmatprep.subr.bf16.mxu0 0
      %1315 = vmatpush1.bf16.msra.mxu0 %v1148
      %1316 = vmatprep.subr.bf16.mxu0 0
      %1317 = vmatpush1.bf16.msra.mxu0 0
      %1318 = vmatprep.subr.bf16.mxu0 0
      %1319 = vmatpush1.bf16.msra.mxu0 0
      %1320 = vmatprep.subr.bf16.mxu0 0
      %1321 = vmatpush1.bf16.msra.mxu0 0
      %1322 = vmatprep.subr.bf16.mxu0 0
      %1323 = vmatpush1.bf16.msra.mxu0 0
      %1324 = vmatprep.subr.bf16.mxu0 0
      %1325 = vmatpush1.bf16.msra.mxu0 0
      %1326 = vmatprep.subr.bf16.mxu0 0
      %1327 = vmatpush1.bf16.msra.mxu0 0
      %1328 = vmatprep.subr.bf16.mxu0 0
      %1329 = vmatpush1.bf16.msra.mxu0 0
      %1330 = vmatprep.subr.bf16.mxu0 0
      %1331 = vmatpush1.bf16.msra.mxu0 0
      %1332 = vmatprep.subr.bf16.mxu0 0
      %1333 = vmatpush1.bf16.msra.mxu0 0
      %1334 = vmatprep.subr.bf16.mxu0 0
      %1335 = vmatpush1.bf16.msra.mxu0 0
      %1336 = vmatprep.subr.bf16.mxu0 0
      %1337 = vmatpush1.bf16.msra.mxu0 0
      %1338 = vmatprep.subr.bf16.mxu0 0
      %1339 = vmatpush1.bf16.msra.mxu0 0
      %1340 = vmatprep.subr.bf16.mxu0 0
      %1341 = vmatpush1.bf16.msra.mxu0 0
      %1342 = vmatprep.subr.bf16.mxu0 0
      %1343 = vmatpush1.bf16.msra.mxu0 0
      %1344 = vmatprep.subr.bf16.mxu0 0
      %1345 = vmatpush1.bf16.msra.mxu0 0
      %1346 = vmatprep.mubr.bf16.mxu0 0
      %1347 = vmatmul.mubr.bf16.gmra.mrb[0].mxu0 %v1121
      %v1348 = vpop.f32.mrb[0].mxu0
      %v1349 = vadd.f32 0.0, %v1348
      %v1350 = vpop.f32.mrb[0].mxu0
      %v1351 = vpop.f32.mrb[0].mxu0
      %v1352 = vpop.f32.mrb[0].mxu0
      %1353 = vdwg.mxu0
      %v1354 = vadd.f32 %v721, %v1185
      %v1355 = vadd.f32 %v723, %v1187
      %v1356 = vadd.f32 %v762, %v1226
      %v1357 = vadd.f32 %v764, %v1228
      %v1358 = vadd.f32 %v803, %v1267
      %v1359 = vadd.f32 %v805, %v1269
      %v1360 = vadd.f32 %v844, %v1308
      %v1361 = vadd.f32 %v846, %v1310
      %v1362 = vadd.f32 %v885, %v1349
      %v1363 = vld [vmem:[%s2] sm:$0xff]
      %1365 = vset.pattern.permute.xlu0 0
      %1366 = vperm.xlu0 %1365, %v1363
      %v1367 = vpop.permute.xlu0 %1366
      %v1369 = vadd.f32 %v1354, %v1367
      %v1370 = vadd.f32 %v1355, %v1367
      %v1371 = vadd.f32 %v1356, %v1367
      %v1372 = vadd.f32 %v1357, %v1367
      %v1373 = vadd.f32 %v1358, %v1367
      %v1374 = vadd.f32 %v1359, %v1367
      %v1375 = vadd.f32 %v1360, %v1367
      %v1376 = vadd.f32 %v1361, %v1367
      %v1377 = vadd.f32 %v1362, %v1367
      %1378 = vst [vmem:[%s208] sm:$0xff] %v1369
      %1379 = vst [vmem:[%s208 + $0x8] sm:$0xff] %v1370
      %1380 = vst [vmem:[%s208 + $0x10] sm:$0xff] %v1371
      %1381 = vst [vmem:[%s208 + $0x18] sm:$0xff] %v1372
      %1382 = vst [vmem:[%s208 + $0x20] sm:$0xff] %v1373
      %1383 = vst [vmem:[%s208 + $0x28] sm:$0xff] %v1374
      %1384 = vst [vmem:[%s208 + $0x30] sm:$0xff] %v1375
      %1385 = vst [vmem:[%s208 + $0x38] sm:$0xff] %v1376
      %vm1386 = vcmask 523264
      %1387 = vst.msk [vmem:[%s208 + $0x40] sm:$0xff] %vm1386, %v1377
      %s1388 = smul.u32 9, %s19
      %p1389 = scmp.lt.s32.totalorder %s18, 1
      %s1390 = scalar_select %p1389, %s18, 1
      %p1391 = scmp.lt.s32.totalorder %s1388, 8
      %s1392 = scalar_select %p1391, %s1388, 8
      %s1393 = smul.addr %s1390, 9
      %s1394 = sadd.s32 %s1392, %s1393
      %s1395 = smul.addr %s1394, 8
      %s1396 = scalar_lea.vmem %s3, %s1395
      // Predicated region
      $region33: #{upsample_conv_layer.1} parent=31 // pred_check
        %p1397 = pneg %p116
      $region34: #{upsample_conv_layer.1} parent=31 // pred_check_branch
        %1399 = sbr.rel (%p1397) target = $region36
      $region35: #{upsample_conv_layer.1} parent=31 // pred_region
        %s1400 = smul.u32 9, %s19
      $region36: #{upsample_conv_layer.1} parent=31 // pred_fallthru
        _
    $region32: #{upsample_conv_layer.1} parent=5 // pred_fallthru
      _
    %p1401 = scmp.le.s32.totalorder 2, %s9
    // Predicated region
    $region37: #{upsample_conv_layer.1} parent=5 // pred_check
      %p1402 = pneg %p1401
    $region38: #{upsample_conv_layer.1} parent=5 // pred_check_branch
      %1404 = sbr.rel (%p1402) target = $region40
    $region39: #{upsample_conv_layer.1} parent=5 // pred_region
      %s1405 = ssub.s32 %s9, 2
      // Predicated region
      $region41: #{upsample_conv_layer.1} parent=39 // pred_check
        %p1406 = pneg %p122
      $region42: #{upsample_conv_layer.1} parent=39 // pred_check_branch
        %1408 = sbr.rel (%p1406) target = $region44
      $region43: #{upsample_conv_layer.1} parent=39 // pred_region
        %s1409 = smul.u32 9, %s21
        %p1410 = scmp.lt.s32.totalorder %s20, 1
        %s1411 = scalar_select %p1410, %s20, 1
        %p1412 = scmp.lt.s32.totalorder %s1409, 8
        %s1413 = scalar_select %p1412, %s1409, 8
        %s1414 = smul.addr %s1411, 9
        %s1415 = sadd.s32 %s1413, %s1414
        %s1416 = smul.addr %s1415, 8
        %s1417 = scalar_lea.vmem %s3, %s1416
      $region44: #{upsample_conv_layer.1} parent=39 // pred_fallthru
        _
    $region40: #{upsample_conv_layer.1} parent=5 // pred_fallthru
      _
  $region6: #{upsample_conv_layer.1} parent=0 // loop_footer
    %s13 = sadd.s32 1, %s9
  $region7: #{upsample_conv_layer.1} parent=0 // loop_footer_branch
    %8 = sbr.rel target = $region3
  $region8: #{upsample_conv_layer.1} parent=0 // loop_exit
    _

</llo_original>
